<compile_context>
chip_gen: v5e
topology: v5e:2x2
jax: 0.10.0
libtpu: 0.0.40
codegen_flags: <defaults>
</compile_context>

<pallas_src>
import jax
import jax.numpy as jnp
import numpy as np
from jax.experimental import pallas as pl
from jax.experimental.pallas import tpu as pltpu

ALPHA = 0.5
TAU = 2.0

B = 8                     # batch
C_IN, H, W = 4, 16, 16
D = C_IN * H * W          # 1024 flattened teacher input features
NUM_CLASSES = 128

_INV_TAU = 1.0 / TAU
_INV_B = 1.0 / B
_DIST_SCALE = (TAU * TAU) / (B * NUM_CLASSES)   # kl_sum -> distillation loss


# ----------------------------------------------------------------------------
# Fused kernel:
#   teacher = x_flat(bf16) @ W_t(bf16) + b_t          (single full-K MXU dot)
#   base    = cross_entropy(outputs, labels)          (mean over batch)
#   dist    = kl_div(log_softmax(kd/T), log_softmax(teacher/T),
#                    reduction='sum', log_target=True) * T*T / kd.numel()
#   loss    = base*(1-alpha) + dist*alpha              (scalar, SMEM output)
# ----------------------------------------------------------------------------
def _fused_distill_kernel(labels_ref,            # SMEM (B,) int32  (prefetch)
                          x_ref, w_ref, b_ref,   # VMEM teacher operands
                          out_ref, kd_ref,       # VMEM student heads
                          loss_ref):             # SMEM (1,1) f32 output
    # ---- teacher forward: logits stay on-chip -------------------------------
    teacher = jnp.dot(x_ref[...], w_ref[...],
                      preferred_element_type=jnp.float32) + b_ref[...]   # (B,C)

    logits = out_ref[...]          # (B, C) f32, class head
    kd = kd_ref[...]               # (B, C) f32, distillation head
    b, c = logits.shape

    # ---- base criterion: cross entropy, mean over batch ---------------------
    m_l = jnp.max(logits, axis=-1, keepdims=True)
    e_l = jnp.exp(logits - m_l)
    logp = logits - m_l - jnp.log(jnp.sum(e_l, axis=-1, keepdims=True))

    col = jax.lax.broadcasted_iota(jnp.int32, (b, c), 1)
    lbl = jnp.concatenate(
        [jnp.full((1, c), labels_ref[i], dtype=jnp.int32) for i in range(b)],
        axis=0)                                                     # (B, C)
    base_loss = -jnp.sum(jnp.where(col == lbl, logp, 0.0)) * _INV_B

    # ---- soft distillation: KL(teacher || student), log_target=True ---------
    ss = kd * _INV_TAU
    m_s = jnp.max(ss, axis=-1, keepdims=True)
    e_s = jnp.exp(ss - m_s)
    s_log = ss - m_s - jnp.log(jnp.sum(e_s, axis=-1, keepdims=True))

    ts = teacher * _INV_TAU
    m_t = jnp.max(ts, axis=-1, keepdims=True)
    e_t = jnp.exp(ts - m_t)
    sum_t = jnp.sum(e_t, axis=-1, keepdims=True)
    t_log = ts - m_t - jnp.log(sum_t)
    p_t = e_t * pl.reciprocal(sum_t, approx=True)   # reuse exp(ts-m) for probs

    dist_loss = jnp.sum(p_t * (t_log - s_log)) * _DIST_SCALE

    loss_ref[0, 0] = base_loss * (1.0 - ALPHA) + dist_loss * ALPHA


def _fused_distillation_loss(labels, x_flat_bf16, w_bf16, b_f32,
                             outputs, outputs_kd):
    grid_spec = pltpu.PrefetchScalarGridSpec(
        num_scalar_prefetch=1,               # labels -> SMEM scalars
        grid=(1,),                           # whole problem fits in one step
        in_specs=[
            pl.BlockSpec((B, D), lambda i, lbl: (0, 0)),             # x  bf16
            pl.BlockSpec((D, NUM_CLASSES), lambda i, lbl: (0, 0)),   # W  bf16
            pl.BlockSpec((1, NUM_CLASSES), lambda i, lbl: (0, 0)),   # b  f32
            pl.BlockSpec((B, NUM_CLASSES), lambda i, lbl: (0, 0)),   # outputs
            pl.BlockSpec((B, NUM_CLASSES), lambda i, lbl: (0, 0)),   # outputs_kd
        ],
        out_specs=pl.BlockSpec(memory_space=pltpu.MemorySpace.SMEM),  # scalar
    )
    out = pl.pallas_call(
        _fused_distill_kernel,
        out_shape=jax.ShapeDtypeStruct((1, 1), jnp.float32),
        grid_spec=grid_spec,
    )(labels, x_flat_bf16, w_bf16, b_f32, outputs, outputs_kd)
    return out[0, 0]


@jax.jit
def distillation_loss_two_heads(inputs, outputs, outputs_kd, labels, w_t, b_t):
    # glue: flatten NCHW teacher input, cast to the teacher's bf16 dtype
    x_flat = inputs.reshape(B, D).astype(jnp.bfloat16)
    return _fused_distillation_loss(labels.astype(jnp.int32), x_flat, w_t, b_t,
                                    outputs, outputs_kd)


# ----------------------------------------------------------------------------
# reference (plain JAX) for verification
# ----------------------------------------------------------------------------
def _reference(inputs, outputs, outputs_kd, labels, w_t, b_t):
    x_flat = inputs.reshape(B, D).astype(jnp.bfloat16)
    teacher = jnp.dot(x_flat, w_t, preferred_element_type=jnp.float32) + b_t[0]
    logp = jax.nn.log_softmax(outputs, axis=1)
    base = -jnp.mean(logp[jnp.arange(B), labels])
    s = jax.nn.log_softmax(outputs_kd / TAU, axis=1)
    t = jax.nn.log_softmax(teacher / TAU, axis=1)
    dist = jnp.sum(jnp.exp(t) * (t - s)) * (TAU * TAU) / (B * NUM_CLASSES)
    return base * (1.0 - ALPHA) + dist * ALPHA


if __name__ == "__main__":
    key = jax.random.PRNGKey(0)
    k1, k2, k3, k4, k5, k6 = jax.random.split(key, 6)

    inputs = jax.random.normal(k1, (B, C_IN, H, W), dtype=jnp.float32)       # NCHW
    outputs = jax.random.normal(k2, (B, NUM_CLASSES), dtype=jnp.float32)     # class head
    outputs_kd = jax.random.normal(k3, (B, NUM_CLASSES), dtype=jnp.float32)  # dist head
    labels = jax.random.randint(k4, (B,), 0, NUM_CLASSES, dtype=jnp.int32)

    # deterministic synthetic teacher parameters (bf16, like the torch teacher)
    w_t = (jax.random.normal(k5, (D, NUM_CLASSES), dtype=jnp.float32)
           * (1.0 / np.sqrt(D))).astype(jnp.bfloat16)
    b_t = (jax.random.normal(k6, (1, NUM_CLASSES), dtype=jnp.float32) * 0.01)

    loss = distillation_loss_two_heads(inputs, outputs, outputs_kd, labels, w_t, b_t)
    jax.block_until_ready(loss)

    ref = _reference(inputs, outputs, outputs_kd, labels, w_t, b_t)
    np.testing.assert_allclose(np.asarray(loss), np.asarray(ref), rtol=1e-3, atol=1e-3)

    print("KERNEL_OK")
</pallas_src>

<mosaic_0001>
module attributes {stable_mosaic.version = 11 : i64} {
  func.func @_fused_distill_kernel(%arg0: i32, %arg1: memref<8xi32, #tpu.memory_space<smem>>, %arg2: memref<8x1024xbf16, #tpu.memory_space<vmem>>, %arg3: memref<1024x128xbf16, #tpu.memory_space<vmem>>, %arg4: memref<1x128xf32, #tpu.memory_space<vmem>>, %arg5: memref<8x128xf32, #tpu.memory_space<vmem>>, %arg6: memref<8x128xf32, #tpu.memory_space<vmem>>, %arg7: memref<1x1xf32, #tpu.memory_space<smem>>) attributes {dimension_semantics = [#tpu.dimension_semantics<arbitrary>], iteration_bounds = array<i64: 1>, scalar_prefetch = 1 : i64, scratch_operands = 0 : i64, tpu.core_type = #tpu.core_type<tc>, window_params = [{pipeline_mode = #tpu.pipeline_mode<synchronous>, transform_indices = @transform_0, window_bounds = array<i64: 8, 1024>}, {pipeline_mode = #tpu.pipeline_mode<synchronous>, transform_indices = @transform_1, window_bounds = array<i64: 1024, 128>}, {pipeline_mode = #tpu.pipeline_mode<synchronous>, transform_indices = @transform_2, window_bounds = array<i64: 1, 128>}, {pipeline_mode = #tpu.pipeline_mode<synchronous>, transform_indices = @transform_3, window_bounds = array<i64: 8, 128>}, {pipeline_mode = #tpu.pipeline_mode<synchronous>, transform_indices = @transform_4, window_bounds = array<i64: 8, 128>}, {transform_indices = @transform_5, window_bounds = array<i64: 1, 1>}]} {
    %c0 = arith.constant 0 : index
    %c0_0 = arith.constant 0 : index
    %0 = vector.load %arg2[%c0, %c0_0] : memref<8x1024xbf16, #tpu.memory_space<vmem>>, vector<8x1024xbf16>
    %c0_1 = arith.constant 0 : index
    %c0_2 = arith.constant 0 : index
    %1 = vector.load %arg3[%c0_1, %c0_2] : memref<1024x128xbf16, #tpu.memory_space<vmem>>, vector<1024x128xbf16>
    %cst = arith.constant dense<0.000000e+00> : vector<8x128xf32>
    %2 = tpu.matmul %0, %1, %cst {dimension_numbers = #tpu.dot_dimension_numbers<[1], [0], [0], [1], [0, 0, 1, 1], [], []>} : vector<8x1024xbf16>, vector<1024x128xbf16>, vector<8x128xf32> -> vector<8x128xf32>
    %c0_3 = arith.constant 0 : index
    %c0_4 = arith.constant 0 : index
    %3 = vector.load %arg4[%c0_3, %c0_4] : memref<1x128xf32, #tpu.memory_space<vmem>>, vector<1x128xf32>
    %4 = vector.broadcast %3 : vector<1x128xf32> to vector<8x128xf32>
    %5 = arith.addf %2, %4 : vector<8x128xf32>
    %c0_5 = arith.constant 0 : index
    %c0_6 = arith.constant 0 : index
    %6 = vector.load %arg5[%c0_5, %c0_6] : memref<8x128xf32, #tpu.memory_space<vmem>>, vector<8x128xf32>
    %c0_7 = arith.constant 0 : index
    %c0_8 = arith.constant 0 : index
    %7 = vector.load %arg6[%c0_7, %c0_8] : memref<8x128xf32, #tpu.memory_space<vmem>>, vector<8x128xf32>
    %cst_9 = arith.constant dense<0xFF800000> : vector<8xf32>
    %8 = vector.multi_reduction <maximumf>, %6, %cst_9 [1] : vector<8x128xf32> to vector<8xf32>
    %9 = vector.shape_cast %8 : vector<8xf32> to vector<8x1xf32>
    %10 = vector.broadcast %9 : vector<8x1xf32> to vector<8x128xf32>
    %11 = arith.subf %6, %10 : vector<8x128xf32>
    %12 = math.exp %11 : vector<8x128xf32>
    %13 = vector.broadcast %9 : vector<8x1xf32> to vector<8x128xf32>
    %14 = arith.subf %6, %13 : vector<8x128xf32>
    %cst_10 = arith.constant dense<0.000000e+00> : vector<8xf32>
    %15 = vector.multi_reduction <add>, %12, %cst_10 [1] : vector<8x128xf32> to vector<8xf32>
    %16 = vector.shape_cast %15 : vector<8xf32> to vector<8x1xf32>
    %17 = math.log %16 : vector<8x1xf32>
    %18 = vector.broadcast %17 : vector<8x1xf32> to vector<8x128xf32>
    %19 = arith.subf %14, %18 : vector<8x128xf32>
    %20 = tpu.iota {dimensions = array<i32: 1>} : vector<8x128xi32>
    %c0_11 = arith.constant 0 : index
    %21 = memref.load %arg1[%c0_11] : memref<8xi32, #tpu.memory_space<smem>>
    %22 = vector.broadcast %21 : i32 to vector<1x128xi32>
    %c1 = arith.constant 1 : index
    %23 = memref.load %arg1[%c1] : memref<8xi32, #tpu.memory_space<smem>>
    %24 = vector.broadcast %23 : i32 to vector<1x128xi32>
    %c2 = arith.constant 2 : index
    %25 = memref.load %arg1[%c2] : memref<8xi32, #tpu.memory_space<smem>>
    %26 = vector.broadcast %25 : i32 to vector<1x128xi32>
    %c3 = arith.constant 3 : index
    %27 = memref.load %arg1[%c3] : memref<8xi32, #tpu.memory_space<smem>>
    %28 = vector.broadcast %27 : i32 to vector<1x128xi32>
    %c4 = arith.constant 4 : index
    %29 = memref.load %arg1[%c4] : memref<8xi32, #tpu.memory_space<smem>>
    %30 = vector.broadcast %29 : i32 to vector<1x128xi32>
    %c5 = arith.constant 5 : index
    %31 = memref.load %arg1[%c5] : memref<8xi32, #tpu.memory_space<smem>>
    %32 = vector.broadcast %31 : i32 to vector<1x128xi32>
    %c6 = arith.constant 6 : index
    %33 = memref.load %arg1[%c6] : memref<8xi32, #tpu.memory_space<smem>>
    %34 = vector.broadcast %33 : i32 to vector<1x128xi32>
    %c7 = arith.constant 7 : index
    %35 = memref.load %arg1[%c7] : memref<8xi32, #tpu.memory_space<smem>>
    %36 = vector.broadcast %35 : i32 to vector<1x128xi32>
    %37 = tpu.concatenate %22, %24, %26, %28, %30, %32, %34, %36 in 0 : vector<1x128xi32>, vector<1x128xi32>, vector<1x128xi32>, vector<1x128xi32>, vector<1x128xi32>, vector<1x128xi32>, vector<1x128xi32>, vector<1x128xi32> -> vector<8x128xi32>
    %38 = arith.cmpi eq, %20, %37 : vector<8x128xi32>
    %cst_12 = arith.constant 0.000000e+00 : f32
    %39 = vector.broadcast %cst_12 : f32 to vector<8x128xf32>
    %40 = arith.select %38, %19, %39 : vector<8x128xi1>, vector<8x128xf32>
    %41 = vector.shape_cast %40 : vector<8x128xf32> to vector<1x8x128xf32>
    %cst_13 = arith.constant dense<0.000000e+00> : vector<1xf32>
    %42 = vector.multi_reduction <add>, %41, %cst_13 [1, 2] : vector<1x8x128xf32> to vector<1xf32>
    %43 = vector.shape_cast %42 : vector<1xf32> to vector<1x1x1xf32>
    %44 = vector.extract %43[0, 0, 0] : f32 from vector<1x1x1xf32>
    %cst_14 = arith.constant 0.000000e+00 : f32
    %45 = arith.subf %cst_14, %44 : f32
    %cst_15 = arith.constant 1.250000e-01 : f32
    %46 = arith.mulf %45, %cst_15 : f32
    %cst_16 = arith.constant 5.000000e-01 : f32
    %47 = vector.broadcast %cst_16 : f32 to vector<8x128xf32>
    %48 = arith.mulf %7, %47 : vector<8x128xf32>
    %cst_17 = arith.constant dense<0xFF800000> : vector<8xf32>
    %49 = vector.multi_reduction <maximumf>, %48, %cst_17 [1] : vector<8x128xf32> to vector<8xf32>
    %50 = vector.shape_cast %49 : vector<8xf32> to vector<8x1xf32>
    %51 = vector.broadcast %50 : vector<8x1xf32> to vector<8x128xf32>
    %52 = arith.subf %48, %51 : vector<8x128xf32>
    %53 = math.exp %52 : vector<8x128xf32>
    %54 = vector.broadcast %50 : vector<8x1xf32> to vector<8x128xf32>
    %55 = arith.subf %48, %54 : vector<8x128xf32>
    %cst_18 = arith.constant dense<0.000000e+00> : vector<8xf32>
    %56 = vector.multi_reduction <add>, %53, %cst_18 [1] : vector<8x128xf32> to vector<8xf32>
    %57 = vector.shape_cast %56 : vector<8xf32> to vector<8x1xf32>
    %58 = math.log %57 : vector<8x1xf32>
    %59 = vector.broadcast %58 : vector<8x1xf32> to vector<8x128xf32>
    %60 = arith.subf %55, %59 : vector<8x128xf32>
    %cst_19 = arith.constant 5.000000e-01 : f32
    %61 = vector.broadcast %cst_19 : f32 to vector<8x128xf32>
    %62 = arith.mulf %5, %61 : vector<8x128xf32>
    %cst_20 = arith.constant dense<0xFF800000> : vector<8xf32>
    %63 = vector.multi_reduction <maximumf>, %62, %cst_20 [1] : vector<8x128xf32> to vector<8xf32>
    %64 = vector.shape_cast %63 : vector<8xf32> to vector<8x1xf32>
    %65 = vector.broadcast %64 : vector<8x1xf32> to vector<8x128xf32>
    %66 = arith.subf %62, %65 : vector<8x128xf32>
    %67 = math.exp %66 : vector<8x128xf32>
    %cst_21 = arith.constant dense<0.000000e+00> : vector<8xf32>
    %68 = vector.multi_reduction <add>, %67, %cst_21 [1] : vector<8x128xf32> to vector<8xf32>
    %69 = vector.shape_cast %68 : vector<8xf32> to vector<8x1xf32>
    %70 = vector.broadcast %64 : vector<8x1xf32> to vector<8x128xf32>
    %71 = arith.subf %62, %70 : vector<8x128xf32>
    %72 = math.log %69 : vector<8x1xf32>
    %73 = vector.broadcast %72 : vector<8x1xf32> to vector<8x128xf32>
    %74 = arith.subf %71, %73 : vector<8x128xf32>
    %75 = tpu.reciprocal %69 {approx = true} : vector<8x1xf32> -> vector<8x1xf32>
    %76 = vector.broadcast %75 : vector<8x1xf32> to vector<8x128xf32>
    %77 = arith.mulf %67, %76 : vector<8x128xf32>
    %78 = arith.subf %74, %60 : vector<8x128xf32>
    %79 = arith.mulf %77, %78 : vector<8x128xf32>
    %80 = vector.shape_cast %79 : vector<8x128xf32> to vector<1x8x128xf32>
    %cst_22 = arith.constant dense<0.000000e+00> : vector<1xf32>
    %81 = vector.multi_reduction <add>, %80, %cst_22 [1, 2] : vector<1x8x128xf32> to vector<1xf32>
    %82 = vector.shape_cast %81 : vector<1xf32> to vector<1x1x1xf32>
    %83 = vector.extract %82[0, 0, 0] : f32 from vector<1x1x1xf32>
    %cst_23 = arith.constant 3.906250e-03 : f32
    %84 = arith.mulf %83, %cst_23 : f32
    %cst_24 = arith.constant 5.000000e-01 : f32
    %85 = arith.mulf %46, %cst_24 : f32
    %cst_25 = arith.constant 5.000000e-01 : f32
    %86 = arith.mulf %84, %cst_25 : f32
    %87 = arith.addf %85, %86 : f32
    %c0_26 = arith.constant 0 : index
    %c0_27 = arith.constant 0 : index
    %88 = memref.load %arg7[%c0_26, %c0_27] : memref<1x1xf32, #tpu.memory_space<smem>>
    memref.store %87, %arg7[%c0_26, %c0_27] : memref<1x1xf32, #tpu.memory_space<smem>>
    return
  }
  func.func @transform_0(%arg0: i32, %arg1: memref<8xi32, #tpu.memory_space<smem>>) -> (i32, i32) {
    %c0_i32 = arith.constant 0 : i32
    %c0_i32_0 = arith.constant 0 : i32
    %c0_i32_1 = arith.constant 0 : i32
    return %c0_i32, %c0_i32_0 : i32, i32
  }
  func.func @transform_1(%arg0: i32, %arg1: memref<8xi32, #tpu.memory_space<smem>>) -> (i32, i32) {
    %c0_i32 = arith.constant 0 : i32
    %c0_i32_0 = arith.constant 0 : i32
    %c0_i32_1 = arith.constant 0 : i32
    return %c0_i32, %c0_i32_0 : i32, i32
  }
  func.func @transform_2(%arg0: i32, %arg1: memref<8xi32, #tpu.memory_space<smem>>) -> (i32, i32) {
    %c0_i32 = arith.constant 0 : i32
    %c0_i32_0 = arith.constant 0 : i32
    %c0_i32_1 = arith.constant 0 : i32
    return %c0_i32, %c0_i32_0 : i32, i32
  }
  func.func @transform_3(%arg0: i32, %arg1: memref<8xi32, #tpu.memory_space<smem>>) -> (i32, i32) {
    %c0_i32 = arith.constant 0 : i32
    %c0_i32_0 = arith.constant 0 : i32
    %c0_i32_1 = arith.constant 0 : i32
    return %c0_i32, %c0_i32_0 : i32, i32
  }
  func.func @transform_4(%arg0: i32, %arg1: memref<8xi32, #tpu.memory_space<smem>>) -> (i32, i32) {
    %c0_i32 = arith.constant 0 : i32
    %c0_i32_0 = arith.constant 0 : i32
    %c0_i32_1 = arith.constant 0 : i32
    return %c0_i32, %c0_i32_0 : i32, i32
  }
  func.func @transform_5(%arg0: i32, %arg1: memref<8xi32, #tpu.memory_space<smem>>) -> (i32, i32) {
    %c0_i32 = arith.constant 0 : i32
    %c0_i32_0 = arith.constant 0 : i32
    %c0_i32_1 = arith.constant 0 : i32
    return %c0_i32, %c0_i32_0 : i32, i32
  }
}

</mosaic_0001>

<llo_original>
// kernel: distillation_loss_two_heads.1
$region0: #{distillation_loss_two_heads.1}
  #allocation0 [shape = 'u32[]', space=smem, size = 0x4, offset = 0x4, fixed_abs, tag = 'smem constant byte address 0x4 - core index']
  #allocation1 [shape = 'u32[72,128]{1,0:T(1,128)}', space=vmem, size = 0x9000, scoped, tag = 'internal scratch']
  #allocation2 [shape = 's32[1]{0}', space=sflag, size = 0x4, scoped, tag = 'scoped memory for distillation_loss_two_heads.1']
  #allocation3 [shape = 'u8[512]{0}', space=smem, size = 0x200, scoped, tag = 'prefetched SMEM operand 0']
  %s0 = inlined_call_operand.vmem [shape: s32[8], index: 0, kind: input, shape index: {}]
  %s1 = inlined_call_operand.vmem [shape: bf16[8,1024], index: 1, kind: input, shape index: {}]
  %s2 = inlined_call_operand.vmem [shape: bf16[1024,128], index: 2, kind: input, shape index: {}]
  %s3 = inlined_call_operand.vmem [shape: f32[1,128], index: 3, kind: input, shape index: {}]
  %s4 = inlined_call_operand.vmem [shape: f32[8,128], index: 4, kind: input, shape index: {}]
  %s5 = inlined_call_operand.vmem [shape: f32[8,128], index: 5, kind: input, shape index: {}]
  %s6 = inlined_call_operand.hbm [shape: f32[1,1], index: 6, kind: output, shape index: {}]
  %s7 = sld [smem:[#allocation0]]
  $region30: #{distillation_loss_two_heads.1} parent=0
    _
  %s9 = ssub.s32 1, %s7
  %s10 = scalar_select 0, %s9, %s7
  %s12 = sshll.u32 %s0, 4
  %s13 = int_to_ptr.vmem [resolvable:$true] %s12
  %15 = dma.vmem_to_smem %s13, 16, [#allocation3], [#allocation2]
  %17 = dma.done [#allocation2], 16
  %18 = sfence
  $region1: #{distillation_loss_two_heads.1} parent=0
    #allocation4 [shape = 'u8[512]{0}', space=smem, size = 0x200, scoped, tag = 'output window, operand 0, single buffered']
    #allocation5 [shape = 's32[1]{0}', space=sflag, size = 0x4, scoped, tag = 'scoped memory for distillation_loss_two_heads.1']
    %19 = vsyncpa [#allocation5], 0
    // Predicated region
    $region2: #{distillation_loss_two_heads.1} parent=1 // pred_check
      _
    $region3: #{distillation_loss_two_heads.1} parent=1 // pred_check_branch
      %21 = sbr.rel (0) target = $region5
    $region4: #{distillation_loss_two_heads.1} parent=1 // pred_region
      _
    $region5: #{distillation_loss_two_heads.1} parent=1 // pred_fallthru
      _
    // Predicated region
    $region6: #{distillation_loss_two_heads.1} parent=1 // pred_check
      _
    $region7: #{distillation_loss_two_heads.1} parent=1 // pred_check_branch
      %23 = sbr.rel (0) target = $region9
    $region8: #{distillation_loss_two_heads.1} parent=1 // pred_region
      _
    $region9: #{distillation_loss_two_heads.1} parent=1 // pred_fallthru
      _
    // Predicated region
    $region10: #{distillation_loss_two_heads.1} parent=1 // pred_check
      _
    $region11: #{distillation_loss_two_heads.1} parent=1 // pred_check_branch
      %25 = sbr.rel (0) target = $region13
    $region12: #{distillation_loss_two_heads.1} parent=1 // pred_region
      _
    $region13: #{distillation_loss_two_heads.1} parent=1 // pred_fallthru
      _
    // Predicated region
    $region14: #{distillation_loss_two_heads.1} parent=1 // pred_check
      _
    $region15: #{distillation_loss_two_heads.1} parent=1 // pred_check_branch
      %27 = sbr.rel (0) target = $region17
    $region16: #{distillation_loss_two_heads.1} parent=1 // pred_region
      _
    $region17: #{distillation_loss_two_heads.1} parent=1 // pred_fallthru
      _
    // Predicated region
    $region18: #{distillation_loss_two_heads.1} parent=1 // pred_check
      _
    $region19: #{distillation_loss_two_heads.1} parent=1 // pred_check_branch
      %29 = sbr.rel (0) target = $region21
    $region20: #{distillation_loss_two_heads.1} parent=1 // pred_region
      _
    $region21: #{distillation_loss_two_heads.1} parent=1 // pred_fallthru
      _
    %v30 = vld [vmem:[%s1] sm:$0xff]
    %v31 = vld [vmem:[%s1 + $0x8] sm:$0xff]
    %v32 = vld [vmem:[%s1 + $0x10] sm:$0xff]
    %v33 = vld [vmem:[%s1 + $0x18] sm:$0xff]
    %v34 = vld [vmem:[%s2] sm:$0xf]
    %v35 = vld [vmem:[%s2 + $0x4] sm:$0xf]
    %v36 = vld [vmem:[%s2 + $0x8] sm:$0xf]
    %v37 = vld [vmem:[%s2 + $0xc] sm:$0xf]
    %v38 = vld [vmem:[%s2 + $0x10] sm:$0xf]
    %v39 = vld [vmem:[%s2 + $0x14] sm:$0xf]
    %v40 = vld [vmem:[%s2 + $0x18] sm:$0xf]
    %v41 = vld [vmem:[%s2 + $0x1c] sm:$0xf]
    %v42 = vld [vmem:[%s2 + $0x20] sm:$0xf]
    %v43 = vld [vmem:[%s2 + $0x24] sm:$0xf]
    %v44 = vld [vmem:[%s2 + $0x28] sm:$0xf]
    %v45 = vld [vmem:[%s2 + $0x2c] sm:$0xf]
    %v46 = vld [vmem:[%s2 + $0x30] sm:$0xf]
    %v47 = vld [vmem:[%s2 + $0x34] sm:$0xf]
    %v48 = vld [vmem:[%s2 + $0x38] sm:$0xf]
    %v49 = vld [vmem:[%s2 + $0x3c] sm:$0xf]
    %v50 = vld [vmem:[%s2 + $0x40] sm:$0xf]
    %v51 = vld [vmem:[%s2 + $0x44] sm:$0xf]
    %v52 = vld [vmem:[%s2 + $0x48] sm:$0xf]
    %v53 = vld [vmem:[%s2 + $0x4c] sm:$0xf]
    %v54 = vld [vmem:[%s2 + $0x50] sm:$0xf]
    %v55 = vld [vmem:[%s2 + $0x54] sm:$0xf]
    %v56 = vld [vmem:[%s2 + $0x58] sm:$0xf]
    %v57 = vld [vmem:[%s2 + $0x5c] sm:$0xf]
    %v58 = vld [vmem:[%s2 + $0x60] sm:$0xf]
    %v59 = vld [vmem:[%s2 + $0x64] sm:$0xf]
    %v60 = vld [vmem:[%s2 + $0x68] sm:$0xf]
    %v61 = vld [vmem:[%s2 + $0x6c] sm:$0xf]
    %v62 = vld [vmem:[%s2 + $0x70] sm:$0xf]
    %v63 = vld [vmem:[%s2 + $0x74] sm:$0xf]
    %v64 = vld [vmem:[%s2 + $0x78] sm:$0xf]
    %v65 = vld [vmem:[%s2 + $0x7c] sm:$0xf]
    %v66 = vld [vmem:[%s2 + $0x80] sm:$0xf]
    %v67 = vld [vmem:[%s2 + $0x84] sm:$0xf]
    %v68 = vld [vmem:[%s2 + $0x88] sm:$0xf]
    %v69 = vld [vmem:[%s2 + $0x8c] sm:$0xf]
    %v70 = vld [vmem:[%s2 + $0x90] sm:$0xf]
    %v71 = vld [vmem:[%s2 + $0x94] sm:$0xf]
    %v72 = vld [vmem:[%s2 + $0x98] sm:$0xf]
    %v73 = vld [vmem:[%s2 + $0x9c] sm:$0xf]
    %v74 = vld [vmem:[%s2 + $0xa0] sm:$0xf]
    %v75 = vld [vmem:[%s2 + $0xa4] sm:$0xf]
    %v76 = vld [vmem:[%s2 + $0xa8] sm:$0xf]
    %v77 = vld [vmem:[%s2 + $0xac] sm:$0xf]
    %v78 = vld [vmem:[%s2 + $0xb0] sm:$0xf]
    %v79 = vld [vmem:[%s2 + $0xb4] sm:$0xf]
    %v80 = vld [vmem:[%s2 + $0xb8] sm:$0xf]
    %v81 = vld [vmem:[%s2 + $0xbc] sm:$0xf]
    %v82 = vld [vmem:[%s2 + $0xc0] sm:$0xf]
    %v83 = vld [vmem:[%s2 + $0xc4] sm:$0xf]
    %v84 = vld [vmem:[%s2 + $0xc8] sm:$0xf]
    %v85 = vld [vmem:[%s2 + $0xcc] sm:$0xf]
    %v86 = vld [vmem:[%s2 + $0xd0] sm:$0xf]
    %v87 = vld [vmem:[%s2 + $0xd4] sm:$0xf]
    %v88 = vld [vmem:[%s2 + $0xd8] sm:$0xf]
    %v89 = vld [vmem:[%s2 + $0xdc] sm:$0xf]
    %v90 = vld [vmem:[%s2 + $0xe0] sm:$0xf]
    %v91 = vld [vmem:[%s2 + $0xe4] sm:$0xf]
    %v92 = vld [vmem:[%s2 + $0xe8] sm:$0xf]
    %v93 = vld [vmem:[%s2 + $0xec] sm:$0xf]
    %v94 = vld [vmem:[%s2 + $0xf0] sm:$0xf]
    %v95 = vld [vmem:[%s2 + $0xf4] sm:$0xf]
    %v96 = vld [vmem:[%s2 + $0xf8] sm:$0xf]
    %v97 = vld [vmem:[%s2 + $0xfc] sm:$0xf]
    %v98 = vld [vmem:[%s2 + $0x100] sm:$0xf]
    %v99 = vld [vmem:[%s2 + $0x104] sm:$0xf]
    %v100 = vld [vmem:[%s2 + $0x108] sm:$0xf]
    %v101 = vld [vmem:[%s2 + $0x10c] sm:$0xf]
    %v102 = vld [vmem:[%s2 + $0x110] sm:$0xf]
    %v103 = vld [vmem:[%s2 + $0x114] sm:$0xf]
    %v104 = vld [vmem:[%s2 + $0x118] sm:$0xf]
    %v105 = vld [vmem:[%s2 + $0x11c] sm:$0xf]
    %v106 = vld [vmem:[%s2 + $0x120] sm:$0xf]
    %v107 = vld [vmem:[%s2 + $0x124] sm:$0xf]
    %v108 = vld [vmem:[%s2 + $0x128] sm:$0xf]
    %v109 = vld [vmem:[%s2 + $0x12c] sm:$0xf]
    %v110 = vld [vmem:[%s2 + $0x130] sm:$0xf]
    %v111 = vld [vmem:[%s2 + $0x134] sm:$0xf]
    %v112 = vld [vmem:[%s2 + $0x138] sm:$0xf]
    %v113 = vld [vmem:[%s2 + $0x13c] sm:$0xf]
    %v114 = vld [vmem:[%s2 + $0x140] sm:$0xf]
    %v115 = vld [vmem:[%s2 + $0x144] sm:$0xf]
    %v116 = vld [vmem:[%s2 + $0x148] sm:$0xf]
    %v117 = vld [vmem:[%s2 + $0x14c] sm:$0xf]
    %v118 = vld [vmem:[%s2 + $0x150] sm:$0xf]
    %v119 = vld [vmem:[%s2 + $0x154] sm:$0xf]
    %v120 = vld [vmem:[%s2 + $0x158] sm:$0xf]
    %v121 = vld [vmem:[%s2 + $0x15c] sm:$0xf]
    %v122 = vld [vmem:[%s2 + $0x160] sm:$0xf]
    %v123 = vld [vmem:[%s2 + $0x164] sm:$0xf]
    %v124 = vld [vmem:[%s2 + $0x168] sm:$0xf]
    %v125 = vld [vmem:[%s2 + $0x16c] sm:$0xf]
    %v126 = vld [vmem:[%s2 + $0x170] sm:$0xf]
    %v127 = vld [vmem:[%s2 + $0x174] sm:$0xf]
    %v128 = vld [vmem:[%s2 + $0x178] sm:$0xf]
    %v129 = vld [vmem:[%s2 + $0x17c] sm:$0xf]
    %v130 = vld [vmem:[%s2 + $0x180] sm:$0xf]
    %v131 = vld [vmem:[%s2 + $0x184] sm:$0xf]
    %v132 = vld [vmem:[%s2 + $0x188] sm:$0xf]
    %v133 = vld [vmem:[%s2 + $0x18c] sm:$0xf]
    %v134 = vld [vmem:[%s2 + $0x190] sm:$0xf]
    %v135 = vld [vmem:[%s2 + $0x194] sm:$0xf]
    %v136 = vld [vmem:[%s2 + $0x198] sm:$0xf]
    %v137 = vld [vmem:[%s2 + $0x19c] sm:$0xf]
    %v138 = vld [vmem:[%s2 + $0x1a0] sm:$0xf]
    %v139 = vld [vmem:[%s2 + $0x1a4] sm:$0xf]
    %v140 = vld [vmem:[%s2 + $0x1a8] sm:$0xf]
    %v141 = vld [vmem:[%s2 + $0x1ac] sm:$0xf]
    %v142 = vld [vmem:[%s2 + $0x1b0] sm:$0xf]
    %v143 = vld [vmem:[%s2 + $0x1b4] sm:$0xf]
    %v144 = vld [vmem:[%s2 + $0x1b8] sm:$0xf]
    %v145 = vld [vmem:[%s2 + $0x1bc] sm:$0xf]
    %v146 = vld [vmem:[%s2 + $0x1c0] sm:$0xf]
    %v147 = vld [vmem:[%s2 + $0x1c4] sm:$0xf]
    %v148 = vld [vmem:[%s2 + $0x1c8] sm:$0xf]
    %v149 = vld [vmem:[%s2 + $0x1cc] sm:$0xf]
    %v150 = vld [vmem:[%s2 + $0x1d0] sm:$0xf]
    %v151 = vld [vmem:[%s2 + $0x1d4] sm:$0xf]
    %v152 = vld [vmem:[%s2 + $0x1d8] sm:$0xf]
    %v153 = vld [vmem:[%s2 + $0x1dc] sm:$0xf]
    %v154 = vld [vmem:[%s2 + $0x1e0] sm:$0xf]
    %v155 = vld [vmem:[%s2 + $0x1e4] sm:$0xf]
    %v156 = vld [vmem:[%s2 + $0x1e8] sm:$0xf]
    %v157 = vld [vmem:[%s2 + $0x1ec] sm:$0xf]
    %v158 = vld [vmem:[%s2 + $0x1f0] sm:$0xf]
    %v159 = vld [vmem:[%s2 + $0x1f4] sm:$0xf]
    %v160 = vld [vmem:[%s2 + $0x1f8] sm:$0xf]
    %v161 = vld [vmem:[%s2 + $0x1fc] sm:$0xf]
    %v162 = vld [vmem:[%s3] sm:$0x1]
    %v164 = vperm.slane %v162, 0
    %v170 = vunpack.c.l.b16 %v30
    %v171 = vunpack.c.h.b16 %v30
    %v172 = vunpack.c.l.b16 %v31
    %v173 = vunpack.c.h.b16 %v31
    %v174 = vunpack.c.l.b16 %v32
    %v175 = vunpack.c.h.b16 %v32
    %v176 = vunpack.c.l.b16 %v33
    %v177 = vunpack.c.h.b16 %v33
    %v178 = vpack.c.b16 %v170, %v170
    %v179 = vpack.c.b16 %v171, %v171
    %v180 = vpack.c.b16 %v172, %v172
    %v181 = vpack.c.b16 %v173, %v173
    %v182 = vpack.c.b16 %v174, %v174
    %v183 = vpack.c.b16 %v175, %v175
    %v184 = vpack.c.b16 %v176, %v176
    %v185 = vpack.c.b16 %v177, %v177
    %v322 = vunpack.c.l.b16 %v34
    %v323 = vunpack.c.l.b16 %v35
    %v324 = vunpack.c.l.b16 %v36
    %v325 = vunpack.c.l.b16 %v37
    %v326 = vunpack.c.l.b16 %v38
    %v327 = vunpack.c.l.b16 %v39
    %v328 = vunpack.c.l.b16 %v40
    %v329 = vunpack.c.l.b16 %v41
    %v330 = vunpack.c.l.b16 %v42
    %v331 = vunpack.c.l.b16 %v43
    %v332 = vunpack.c.l.b16 %v44
    %v333 = vunpack.c.l.b16 %v45
    %v334 = vunpack.c.l.b16 %v46
    %v335 = vunpack.c.l.b16 %v47
    %v336 = vunpack.c.l.b16 %v48
    %v337 = vunpack.c.l.b16 %v49
    %v338 = vunpack.c.l.b16 %v50
    %v339 = vunpack.c.l.b16 %v51
    %v340 = vunpack.c.l.b16 %v52
    %v341 = vunpack.c.l.b16 %v53
    %v342 = vunpack.c.l.b16 %v54
    %v343 = vunpack.c.l.b16 %v55
    %v344 = vunpack.c.l.b16 %v56
    %v345 = vunpack.c.l.b16 %v57
    %v346 = vunpack.c.l.b16 %v58
    %v347 = vunpack.c.l.b16 %v59
    %v348 = vunpack.c.l.b16 %v60
    %v349 = vunpack.c.l.b16 %v61
    %v350 = vunpack.c.l.b16 %v62
    %v351 = vunpack.c.l.b16 %v63
    %v352 = vunpack.c.l.b16 %v64
    %v353 = vunpack.c.l.b16 %v65
    %v354 = vunpack.c.l.b16 %v66
    %v355 = vunpack.c.l.b16 %v67
    %v356 = vunpack.c.l.b16 %v68
    %v357 = vunpack.c.l.b16 %v69
    %v358 = vunpack.c.l.b16 %v70
    %v359 = vunpack.c.l.b16 %v71
    %v360 = vunpack.c.l.b16 %v72
    %v361 = vunpack.c.l.b16 %v73
    %v362 = vunpack.c.l.b16 %v74
    %v363 = vunpack.c.l.b16 %v75
    %v364 = vunpack.c.l.b16 %v76
    %v365 = vunpack.c.l.b16 %v77
    %v366 = vunpack.c.l.b16 %v78
    %v367 = vunpack.c.l.b16 %v79
    %v368 = vunpack.c.l.b16 %v80
    %v369 = vunpack.c.l.b16 %v81
    %v370 = vunpack.c.l.b16 %v82
    %v371 = vunpack.c.l.b16 %v83
    %v372 = vunpack.c.l.b16 %v84
    %v373 = vunpack.c.l.b16 %v85
    %v374 = vunpack.c.l.b16 %v86
    %v375 = vunpack.c.l.b16 %v87
    %v376 = vunpack.c.l.b16 %v88
    %v377 = vunpack.c.l.b16 %v89
    %v378 = vunpack.c.l.b16 %v90
    %v379 = vunpack.c.l.b16 %v91
    %v380 = vunpack.c.l.b16 %v92
    %v381 = vunpack.c.l.b16 %v93
    %v382 = vunpack.c.l.b16 %v94
    %v383 = vunpack.c.l.b16 %v95
    %v384 = vunpack.c.l.b16 %v96
    %v385 = vunpack.c.l.b16 %v97
    %v386 = vunpack.c.l.b16 %v98
    %v387 = vunpack.c.l.b16 %v99
    %v388 = vunpack.c.l.b16 %v100
    %v389 = vunpack.c.l.b16 %v101
    %v390 = vunpack.c.l.b16 %v102
    %v391 = vunpack.c.l.b16 %v103
    %v392 = vunpack.c.l.b16 %v104
    %v393 = vunpack.c.l.b16 %v105
    %v394 = vunpack.c.l.b16 %v106
    %v395 = vunpack.c.l.b16 %v107
    %v396 = vunpack.c.l.b16 %v108
    %v397 = vunpack.c.l.b16 %v109
    %v398 = vunpack.c.l.b16 %v110
    %v399 = vunpack.c.l.b16 %v111
    %v400 = vunpack.c.l.b16 %v112
    %v401 = vunpack.c.l.b16 %v113
    %v402 = vunpack.c.l.b16 %v114
    %v403 = vunpack.c.l.b16 %v115
    %v404 = vunpack.c.l.b16 %v116
    %v405 = vunpack.c.l.b16 %v117
    %v406 = vunpack.c.l.b16 %v118
    %v407 = vunpack.c.l.b16 %v119
    %v408 = vunpack.c.l.b16 %v120
    %v409 = vunpack.c.l.b16 %v121
    %v410 = vunpack.c.l.b16 %v122
    %v411 = vunpack.c.l.b16 %v123
    %v412 = vunpack.c.l.b16 %v124
    %v413 = vunpack.c.l.b16 %v125
    %v414 = vunpack.c.l.b16 %v126
    %v415 = vunpack.c.l.b16 %v127
    %v416 = vunpack.c.l.b16 %v128
    %v417 = vunpack.c.l.b16 %v129
    %v418 = vunpack.c.l.b16 %v130
    %v419 = vunpack.c.l.b16 %v131
    %v420 = vunpack.c.l.b16 %v132
    %v421 = vunpack.c.l.b16 %v133
    %v422 = vunpack.c.l.b16 %v134
    %v423 = vunpack.c.l.b16 %v135
    %v424 = vunpack.c.l.b16 %v136
    %v425 = vunpack.c.l.b16 %v137
    %v426 = vunpack.c.l.b16 %v138
    %v427 = vunpack.c.l.b16 %v139
    %v428 = vunpack.c.l.b16 %v140
    %v429 = vunpack.c.l.b16 %v141
    %v430 = vunpack.c.l.b16 %v142
    %v431 = vunpack.c.l.b16 %v143
    %v432 = vunpack.c.l.b16 %v144
    %v433 = vunpack.c.l.b16 %v145
    %v434 = vunpack.c.l.b16 %v146
    %v435 = vunpack.c.l.b16 %v147
    %v436 = vunpack.c.l.b16 %v148
    %v437 = vunpack.c.l.b16 %v149
    %v438 = vunpack.c.l.b16 %v150
    %v439 = vunpack.c.l.b16 %v151
    %v440 = vunpack.c.l.b16 %v152
    %v441 = vunpack.c.l.b16 %v153
    %v442 = vunpack.c.l.b16 %v154
    %v443 = vunpack.c.l.b16 %v155
    %v444 = vunpack.c.l.b16 %v156
    %v445 = vunpack.c.l.b16 %v157
    %v446 = vunpack.c.l.b16 %v158
    %v447 = vunpack.c.l.b16 %v159
    %v448 = vunpack.c.l.b16 %v160
    %v449 = vunpack.c.l.b16 %v161
    %v450 = vpack.c.b16 %v323, %v322
    %v451 = vpack.c.b16 %v325, %v324
    %v452 = vpack.c.b16 %v327, %v326
    %v453 = vpack.c.b16 %v329, %v328
    %v454 = vpack.c.b16 %v331, %v330
    %v455 = vpack.c.b16 %v333, %v332
    %v456 = vpack.c.b16 %v335, %v334
    %v457 = vpack.c.b16 %v337, %v336
    %v458 = vpack.c.b16 %v339, %v338
    %v459 = vpack.c.b16 %v341, %v340
    %v460 = vpack.c.b16 %v343, %v342
    %v461 = vpack.c.b16 %v345, %v344
    %v462 = vpack.c.b16 %v347, %v346
    %v463 = vpack.c.b16 %v349, %v348
    %v464 = vpack.c.b16 %v351, %v350
    %v465 = vpack.c.b16 %v353, %v352
    %v466 = vpack.c.b16 %v355, %v354
    %v467 = vpack.c.b16 %v357, %v356
    %v468 = vpack.c.b16 %v359, %v358
    %v469 = vpack.c.b16 %v361, %v360
    %v470 = vpack.c.b16 %v363, %v362
    %v471 = vpack.c.b16 %v365, %v364
    %v472 = vpack.c.b16 %v367, %v366
    %v473 = vpack.c.b16 %v369, %v368
    %v474 = vpack.c.b16 %v371, %v370
    %v475 = vpack.c.b16 %v373, %v372
    %v476 = vpack.c.b16 %v375, %v374
    %v477 = vpack.c.b16 %v377, %v376
    %v478 = vpack.c.b16 %v379, %v378
    %v479 = vpack.c.b16 %v381, %v380
    %v480 = vpack.c.b16 %v383, %v382
    %v481 = vpack.c.b16 %v385, %v384
    %v482 = vpack.c.b16 %v387, %v386
    %v483 = vpack.c.b16 %v389, %v388
    %v484 = vpack.c.b16 %v391, %v390
    %v485 = vpack.c.b16 %v393, %v392
    %v486 = vpack.c.b16 %v395, %v394
    %v487 = vpack.c.b16 %v397, %v396
    %v488 = vpack.c.b16 %v399, %v398
    %v489 = vpack.c.b16 %v401, %v400
    %v490 = vpack.c.b16 %v403, %v402
    %v491 = vpack.c.b16 %v405, %v404
    %v492 = vpack.c.b16 %v407, %v406
    %v493 = vpack.c.b16 %v409, %v408
    %v494 = vpack.c.b16 %v411, %v410
    %v495 = vpack.c.b16 %v413, %v412
    %v496 = vpack.c.b16 %v415, %v414
    %v497 = vpack.c.b16 %v417, %v416
    %v498 = vpack.c.b16 %v419, %v418
    %v499 = vpack.c.b16 %v421, %v420
    %v500 = vpack.c.b16 %v423, %v422
    %v501 = vpack.c.b16 %v425, %v424
    %v502 = vpack.c.b16 %v427, %v426
    %v503 = vpack.c.b16 %v429, %v428
    %v504 = vpack.c.b16 %v431, %v430
    %v505 = vpack.c.b16 %v433, %v432
    %v506 = vpack.c.b16 %v435, %v434
    %v507 = vpack.c.b16 %v437, %v436
    %v508 = vpack.c.b16 %v439, %v438
    %v509 = vpack.c.b16 %v441, %v440
    %v510 = vpack.c.b16 %v443, %v442
    %v511 = vpack.c.b16 %v445, %v444
    %v512 = vpack.c.b16 %v447, %v446
    %v513 = vpack.c.b16 %v449, %v448
    %578 = vmatpush.bf16.msra.mxu0 %v457
    %579 = vmatpush.bf16.msra.mxu0 %v456
    %580 = vmatpush.bf16.msra.mxu0 %v455
    %581 = vmatpush.bf16.msra.mxu0 %v454
    %582 = vmatpush.bf16.msra.mxu0 %v453
    %583 = vmatpush.bf16.msra.mxu0 %v452
    %584 = vmatpush.bf16.msra.mxu0 %v451
    %585 = vmatpush.bf16.msra.mxu0 %v450
    %586 = vmatmul.bf16.gmra.mxu0 %v178
    %v587 = vpop.f32.mrf.mxu0
    %v588 = vadd.f32 %v164, %v587
    %v589 = vpop.f32.mrf.mxu0
    %590 = vdwg.mxu0
    %591 = vmatpush.bf16.msra.mxu0 %v465
    %592 = vmatpush.bf16.msra.mxu0 %v464
    %593 = vmatpush.bf16.msra.mxu0 %v463
    %594 = vmatpush.bf16.msra.mxu0 %v462
    %595 = vmatpush.bf16.msra.mxu0 %v461
    %596 = vmatpush.bf16.msra.mxu0 %v460
    %597 = vmatpush.bf16.msra.mxu0 %v459
    %598 = vmatpush.bf16.msra.mxu0 %v458
    %599 = vmatmul.bf16.gmra.mxu0 %v179
    %v600 = vpop.f32.mrf.mxu0
    %v601 = vadd.f32 %v588, %v600
    %v602 = vpop.f32.mrf.mxu0
    %603 = vdwg.mxu0
    %604 = vmatpush.bf16.msra.mxu0 %v473
    %605 = vmatpush.bf16.msra.mxu0 %v472
    %606 = vmatpush.bf16.msra.mxu0 %v471
    %607 = vmatpush.bf16.msra.mxu0 %v470
    %608 = vmatpush.bf16.msra.mxu0 %v469
    %609 = vmatpush.bf16.msra.mxu0 %v468
    %610 = vmatpush.bf16.msra.mxu0 %v467
    %611 = vmatpush.bf16.msra.mxu0 %v466
    %612 = vmatmul.bf16.gmra.mxu0 %v180
    %v613 = vpop.f32.mrf.mxu0
    %v614 = vadd.f32 %v601, %v613
    %v615 = vpop.f32.mrf.mxu0
    %616 = vdwg.mxu0
    %617 = vmatpush.bf16.msra.mxu0 %v481
    %618 = vmatpush.bf16.msra.mxu0 %v480
    %619 = vmatpush.bf16.msra.mxu0 %v479
    %620 = vmatpush.bf16.msra.mxu0 %v478
    %621 = vmatpush.bf16.msra.mxu0 %v477
    %622 = vmatpush.bf16.msra.mxu0 %v476
    %623 = vmatpush.bf16.msra.mxu0 %v475
    %624 = vmatpush.bf16.msra.mxu0 %v474
    %625 = vmatmul.bf16.gmra.mxu0 %v181
    %v626 = vpop.f32.mrf.mxu0
    %v627 = vadd.f32 %v614, %v626
    %v628 = vpop.f32.mrf.mxu0
    %629 = vdwg.mxu0
    %630 = vmatpush.bf16.msra.mxu0 %v489
    %631 = vmatpush.bf16.msra.mxu0 %v488
    %632 = vmatpush.bf16.msra.mxu0 %v487
    %633 = vmatpush.bf16.msra.mxu0 %v486
    %634 = vmatpush.bf16.msra.mxu0 %v485
    %635 = vmatpush.bf16.msra.mxu0 %v484
    %636 = vmatpush.bf16.msra.mxu0 %v483
    %637 = vmatpush.bf16.msra.mxu0 %v482
    %638 = vmatmul.bf16.gmra.mxu0 %v182
    %v639 = vpop.f32.mrf.mxu0
    %v640 = vadd.f32 %v627, %v639
    %v641 = vpop.f32.mrf.mxu0
    %642 = vdwg.mxu0
    %643 = vmatpush.bf16.msra.mxu0 %v497
    %644 = vmatpush.bf16.msra.mxu0 %v496
    %645 = vmatpush.bf16.msra.mxu0 %v495
    %646 = vmatpush.bf16.msra.mxu0 %v494
    %647 = vmatpush.bf16.msra.mxu0 %v493
    %648 = vmatpush.bf16.msra.mxu0 %v492
    %649 = vmatpush.bf16.msra.mxu0 %v491
    %650 = vmatpush.bf16.msra.mxu0 %v490
    %651 = vmatmul.bf16.gmra.mxu0 %v183
    %v652 = vpop.f32.mrf.mxu0
    %v653 = vadd.f32 %v640, %v652
    %v654 = vpop.f32.mrf.mxu0
    %655 = vdwg.mxu0
    %656 = vmatpush.bf16.msra.mxu0 %v505
    %657 = vmatpush.bf16.msra.mxu0 %v504
    %658 = vmatpush.bf16.msra.mxu0 %v503
    %659 = vmatpush.bf16.msra.mxu0 %v502
    %660 = vmatpush.bf16.msra.mxu0 %v501
    %661 = vmatpush.bf16.msra.mxu0 %v500
    %662 = vmatpush.bf16.msra.mxu0 %v499
    %663 = vmatpush.bf16.msra.mxu0 %v498
    %664 = vmatmul.bf16.gmra.mxu0 %v184
    %v665 = vpop.f32.mrf.mxu0
    %v666 = vadd.f32 %v653, %v665
    %v667 = vpop.f32.mrf.mxu0
    %668 = vdwg.mxu0
    %669 = vmatpush.bf16.msra.mxu0 %v513
    %670 = vmatpush.bf16.msra.mxu0 %v512
    %671 = vmatpush.bf16.msra.mxu0 %v511
    %672 = vmatpush.bf16.msra.mxu0 %v510
    %673 = vmatpush.bf16.msra.mxu0 %v509
    %674 = vmatpush.bf16.msra.mxu0 %v508
    %675 = vmatpush.bf16.msra.mxu0 %v507
    %676 = vmatpush.bf16.msra.mxu0 %v506
    %677 = vmatmul.bf16.gmra.mxu0 %v185
    %v678 = vpop.f32.mrf.mxu0
    %v679 = vadd.f32 %v666, %v678
    %v680 = vpop.f32.mrf.mxu0
    %681 = vdwg.mxu0
    %v682 = vld [vmem:[%s4] sm:$0xff]
    %v683 = vld [vmem:[%s5] sm:$0xff]
    %684 = vmax.xlane.f32.xlu0 %v682
    %v685 = vpop.xlane.xlu0 %684
    %v686 = vsub.f32 %v682, %v685
    %v687 = vmul.f32 %v686, 1.442695
    %v688 = vpow.pop %v687
    %689 = vadd.xlane.f32.xlu0 %v688
    %v690 = vpop.xlane.xlu0 %689
    %v691 = vlog2.pop %v690
    %v692 = vmul.f32 %v691, 0.6931472
    %v693 = vsub.f32 %v686, %v692
    %v694 = vlaneseq
    %v695 = vand.u32 %v694, 127
    %s696 = sld [smem:[#allocation3]]
    %v697 = vstv %s696
    %s698 = sld [smem:[#allocation3 + $0x1]]
    %v699 = vstv %s698
    %s700 = sld [smem:[#allocation3 + $0x2]]
    %v701 = vstv %s700
    %s702 = sld [smem:[#allocation3 + $0x3]]
    %v703 = vstv %s702
    %s704 = sld [smem:[#allocation3 + $0x4]]
    %v705 = vstv %s704
    %s706 = sld [smem:[#allocation3 + $0x5]]
    %v707 = vstv %s706
    %s708 = sld [smem:[#allocation3 + $0x6]]
    %v709 = vstv %s708
    %s710 = sld [smem:[#allocation3 + $0x7]]
    %v711 = vstv %s710
    %vm712 = vcmask 1040384
    %v713 = vsel %vm712, %v697, %v699
    %vm714 = vcmask 1041408
    %v715 = vsel %vm714, %v713, %v701
    %vm716 = vcmask 1042432
    %v717 = vsel %vm716, %v715, %v703
    %vm718 = vcmask 1043456
    %v719 = vsel %vm718, %v717, %v705
    %vm720 = vcmask 1044480
    %v721 = vsel %vm720, %v719, %v707
    %vm722 = vcmask 1045504
    %v723 = vsel %vm722, %v721, %v709
    %vm724 = vcmask 1046528
    %v725 = vsel %vm724, %v723, %v711
    %vm726 = vcmp.eq.s32.totalorder %v695, %v725
    %v727 = vsel %vm726, %v693, 0.0
    %728 = vadd.xlane.f32.xlu0 %v727
    %v729 = vpop.xlane.xlu0 %728
    %v730 = vrot.slane %v729, 4
    %v731 = vadd.f32 %v729, %v730
    %v732 = vrot.slane %v731, 2
    %v733 = vadd.f32 %v731, %v732
    %v734 = vrot.slane %v733, 1
    %v735 = vadd.f32 %v733, %v734
    %s736 = vtos %v735
    %s737 = ssub.f32 0.0, %s736
    %s738 = smul.f32 %s737, 0.125
    %v739 = vmul.f32 %v683, 0.5
    %740 = vmax.xlane.f32.xlu0 %v739
    %v741 = vpop.xlane.xlu0 %740
    %v742 = vsub.f32 %v739, %v741
    %v743 = vmul.f32 %v742, 1.442695
    %v744 = vpow.pop %v743
    %745 = vadd.xlane.f32.xlu0 %v744
    %v746 = vpop.xlane.xlu0 %745
    %v747 = vlog2.pop %v746
    %v748 = vmul.f32 %v747, 0.6931472
    %v749 = vsub.f32 %v742, %v748
    %v750 = vmul.f32 %v679, 0.5
    %751 = vmax.xlane.f32.xlu0 %v750
    %v752 = vpop.xlane.xlu0 %751
    %v753 = vsub.f32 %v750, %v752
    %v754 = vmul.f32 %v753, 1.442695
    %v755 = vpow.pop %v754
    %756 = vadd.xlane.f32.xlu0 %v755
    %v757 = vpop.xlane.xlu0 %756
    %v758 = vlog2.pop %v757
    %v759 = vmul.f32 %v758, 0.6931472
    %v760 = vsub.f32 %v753, %v759
    %v761 = vrcp.pop %v757
    %v762 = vmul.f32 %v755, %v761
    %v763 = vsub.f32 %v760, %v749
    %v764 = vmul.f32 %v762, %v763
    %765 = vadd.xlane.f32.xlu0 %v764
    %v766 = vpop.xlane.xlu0 %765
    %v767 = vrot.slane %v766, 4
    %v768 = vadd.f32 %v766, %v767
    %v769 = vrot.slane %v768, 2
    %v770 = vadd.f32 %v768, %v769
    %v771 = vrot.slane %v770, 1
    %v772 = vadd.f32 %v770, %v771
    %s773 = vtos %v772
    %s774 = smul.f32 %s773, 0.00390625
    %s775 = smul.f32 %s738, 0.5
    %s776 = smul.f32 %s774, 0.5
    %s777 = sadd.f32 %s775, %s776
    %s778 = scalar_lea.smem [#allocation4], 0
    %779 = sst [smem:[%s778]] %s777
    // Predicated region
    $region22: #{distillation_loss_two_heads.1} parent=1 // pred_check
      _
    $region23: #{distillation_loss_two_heads.1} parent=1 // pred_check_branch
      %781 = sbr.rel (0) target = $region25
    $region24: #{distillation_loss_two_heads.1} parent=1 // pred_region
      %783 = vsyncadd [#allocation5], 0
      %s785 = sshll.u32 %s6, 4
      %s786 = int_to_ptr.hbm [resolvable:$true] %s785
      %788 = dma.smem_to_hbm [#allocation4], 16, %s786, [#allocation5]
    $region25: #{distillation_loss_two_heads.1} parent=1 // pred_fallthru
      _
    // Predicated region
    $region26: #{distillation_loss_two_heads.1} parent=1 // pred_check
      _
    $region27: #{distillation_loss_two_heads.1} parent=1 // pred_check_branch
      %790 = sbr.rel (0) target = $region29
    $region28: #{distillation_loss_two_heads.1} parent=1 // pred_region
      %792 = dma.done [#allocation5], 16
    $region29: #{distillation_loss_two_heads.1} parent=1 // pred_fallthru
      _
    %793 = sfence
    %794 = vsyncpa [#allocation5], 1

</llo_original>
